<compile_context>
chip_gen: v6e
topology: v6e:2x2x1
jax: 0.10.0
libtpu: 0.0.40
codegen_flags: <defaults>
</compile_context>

<pallas_src>
import functools

import jax
import jax.numpy as jnp
from jax.experimental import pallas as pl
from jax.experimental.pallas import tpu as pltpu


HIDDEN = 128     # fixed by the PyTorch module
ROW_ALIGN = 16   # batch-tile row granularity (bf16 sublane pack; fine for f32)


def _round_up(x: int, m: int) -> int:
    return ((x + m - 1) // m) * m


def dqn_mlp_kernel(x_ref, w1_ref, b1_ref, w2_ref, b2_ref, w3_ref, b3_ref, o_ref):
    """Fused 3-layer MLP on one batch tile:
       relu(x @ W1 + b1) -> relu(. @ W2 + b2) -> . @ W3 + b3.

    Matmul operands are cast to the weight dtype (bf16 by default) so the MXU
    runs natively; accumulation, bias add and ReLU stay f32.
    """
    mm_dtype = w1_ref.dtype
    x = x_ref[...].astype(mm_dtype)
    h1 = jnp.dot(x, w1_ref[...], preferred_element_type=jnp.float32) + b1_ref[...]
    h1 = jnp.maximum(h1, 0.0).astype(mm_dtype)
    h2 = jnp.dot(h1, w2_ref[...], preferred_element_type=jnp.float32) + b2_ref[...]
    h2 = jnp.maximum(h2, 0.0).astype(mm_dtype)
    out = jnp.dot(h2, w3_ref[...], preferred_element_type=jnp.float32) + b3_ref[...]
    o_ref[...] = out.astype(o_ref.dtype)


def _choose_tile_b(batch: int, tile_b_max: int) -> int:
    """Batch tile that (a) caps VMEM use, (b) keeps >= 2 grid steps once the
    batch is big enough (v7x megacore sharding), (c) bounds batch-pad waste to
    < ROW_ALIGN rows per tile."""
    n_tiles = max(pl.cdiv(batch, tile_b_max), min(2, pl.cdiv(batch, ROW_ALIGN)))
    return _round_up(pl.cdiv(batch, n_tiles), ROW_ALIGN)


@functools.partial(jax.jit, static_argnames=("tile_b_max", "matmul_dtype"))
def dqn_forward(x, params, *, tile_b_max: int = 4096, matmul_dtype: str = "bfloat16"):
    """Run the fused DQN MLP Pallas kernel.

    x      : [B, input_size] float32
    params : dict with w1 [in,128], b1 [1,128], w2 [128,128], b2 [1,128],
             w3 [128,num_actions], b3 [1,num_actions]   (all float32)
    returns: [B, num_actions] float32
    """
    if matmul_dtype not in ("bfloat16", "float32"):
        raise ValueError(f"unsupported matmul_dtype: {matmul_dtype}")
    mm_dtype = jnp.bfloat16 if matmul_dtype == "bfloat16" else jnp.float32
    mm_itemsize = 2 if matmul_dtype == "bfloat16" else 4

    B, in_size = x.shape
    hidden = params["w1"].shape[1]
    num_actions = params["w3"].shape[1]

    tile_b = _choose_tile_b(B, tile_b_max)
    b_pad = _round_up(B, tile_b)
    grid = (b_pad // tile_b,)

    # Only the batch dim gets padded (sliced off below); K and N stay unpadded.
    x_p = jnp.pad(x, ((0, b_pad - B), (0, 0))) if b_pad != B else x

    # MXU operands (weights) in bf16 (or f32 for exact parity); biases f32.
    w1 = params["w1"].astype(mm_dtype)
    w2 = params["w2"].astype(mm_dtype)
    w3 = params["w3"].astype(mm_dtype)
    b1, b2, b3 = params["b1"], params["b2"], params["b3"]

    flops = 2 * b_pad * (in_size * hidden + hidden * hidden + hidden * num_actions)
    bytes_accessed = (
        4 * b_pad * in_size                                                # x read (f32)
        + 4 * b_pad * num_actions                                          # out write (f32)
        + mm_itemsize * (in_size * hidden + hidden * hidden + hidden * num_actions)  # weights
        + 4 * (2 * hidden + num_actions)                                   # biases
    )

    out = pl.pallas_call(
        dqn_mlp_kernel,
        out_shape=jax.ShapeDtypeStruct((b_pad, num_actions), jnp.float32),
        grid=grid,
        in_specs=[
            # Batch-tiled activations: auto double-buffered across grid steps.
            # Last block dim == full array dim, so unpadded K is legal.
            pl.BlockSpec((tile_b, in_size), lambda i: (i, 0)),
            # Weights / biases: same block every step -> stay VMEM-resident.
            pl.BlockSpec((in_size, hidden), lambda i: (0, 0)),
            pl.BlockSpec((1, hidden), lambda i: (0, 0)),
            pl.BlockSpec((hidden, hidden), lambda i: (0, 0)),
            pl.BlockSpec((1, hidden), lambda i: (0, 0)),
            pl.BlockSpec((hidden, num_actions), lambda i: (0, 0)),
            pl.BlockSpec((1, num_actions), lambda i: (0, 0)),
        ],
        # Unpadded N on the output: block last dim == full array dim.
        out_specs=pl.BlockSpec((tile_b, num_actions), lambda i: (i, 0)),
        compiler_params=pltpu.CompilerParams(
            dimension_semantics=("parallel",),     # megacore sharding on v7x
            vmem_limit_bytes=32 * 1024 * 1024,     # explicit scoped-VMEM limit, safe on v5e/v6e/v7x
        ),
        cost_estimate=pl.CostEstimate(
            flops=flops, transcendentals=0, bytes_accessed=bytes_accessed),
    )(x_p, w1, b1, w2, b2, w3, b3)

    # Slice off padded batch rows only. There are no padded Q columns anymore,
    # so a downstream argmax over actions sees exactly the model's outputs.
    return out[:B]


def init_dqn_params(key, input_size, num_actions, hidden=HIDDEN):
    """Deterministic init mimicking torch.nn.Linear default
    (U(-1/sqrt(fan_in), 1/sqrt(fan_in))). Weights stored [in, out] so the
    kernel computes y = x @ W + b directly on the MXU."""
    keys = jax.random.split(key, 6)

    def linear(kw, kb, fan_in, fan_out):
        bound = 1.0 / jnp.sqrt(jnp.float32(fan_in))
        w = jax.random.uniform(kw, (fan_in, fan_out), jnp.float32, -bound, bound)
        b = jax.random.uniform(kb, (1, fan_out), jnp.float32, -bound, bound)
        return w, b

    w1, b1 = linear(keys[0], keys[1], input_size, hidden)
    w2, b2 = linear(keys[2], keys[3], hidden, hidden)
    w3, b3 = linear(keys[4], keys[5], hidden, num_actions)
    return {"w1": w1, "b1": b1, "w2": w2, "b2": b2, "w3": w3, "b3": b3}


def dqn_forward_ref(x, p):
    """Pure-JAX reference for correctness check."""
    h1 = jnp.maximum(x @ p["w1"] + p["b1"], 0.0)
    h2 = jnp.maximum(h1 @ p["w2"] + p["b2"], 0.0)
    return h2 @ p["w3"] + p["b3"]


if __name__ == "__main__":
    key = jax.random.PRNGKey(0)
    k_x, k_x2, k_p = jax.random.split(key, 3)

    input_size = 32
    num_actions = 8
    params = init_dqn_params(k_p, input_size, num_actions)

    # Small batch (single tile) and ragged batch (2-step grid + batch padding).
    x_small = jax.random.normal(k_x, (8, input_size), jnp.float32)
    x_ragged = jax.random.normal(k_x2, (20, input_size), jnp.float32)

    for name, xin in (("batch=8", x_small), ("batch=20", x_ragged)):
        ref = dqn_forward_ref(xin, params)

        # Exact-parity f32 MXU path.
        out_f32 = jax.block_until_ready(
            dqn_forward(xin, params, matmul_dtype="float32"))
        assert out_f32.shape == ref.shape
        assert jnp.allclose(out_f32, ref, atol=1e-4, rtol=1e-4), \
            f"f32 mismatch vs reference ({name})"

        # Default bf16-operand path (f32 accumulation) -> looser tolerance.
        out_bf16 = jax.block_until_ready(dqn_forward(xin, params))
        assert out_bf16.shape == ref.shape
        assert jnp.allclose(out_bf16, ref, atol=3e-2, rtol=3e-2), \
            f"bf16 mismatch vs reference ({name})"

    print("KERNEL_OK")
</pallas_src>

<mosaic_0001>
module attributes {stable_mosaic.version = 11 : i64} {
  func.func @dqn_mlp_kernel(%arg0: i32, %arg1: memref<16x32xf32, #tpu.memory_space<vmem>>, %arg2: memref<32x128xf32, #tpu.memory_space<vmem>>, %arg3: memref<1x128xf32, #tpu.memory_space<vmem>>, %arg4: memref<128x128xf32, #tpu.memory_space<vmem>>, %arg5: memref<1x128xf32, #tpu.memory_space<vmem>>, %arg6: memref<128x8xf32, #tpu.memory_space<vmem>>, %arg7: memref<1x8xf32, #tpu.memory_space<vmem>>, %arg8: memref<16x8xf32, #tpu.memory_space<vmem>>) attributes {dimension_semantics = [#tpu.dimension_semantics<parallel>], iteration_bounds = array<i64: 1>, scalar_prefetch = 0 : i64, scratch_operands = 0 : i64, tpu.core_type = #tpu.core_type<tc>, window_params = [{transform_indices = @transform_0, window_bounds = array<i64: 16, 32>}, {pipeline_mode = #tpu.pipeline_mode<synchronous>, transform_indices = @transform_1, window_bounds = array<i64: 32, 128>}, {pipeline_mode = #tpu.pipeline_mode<synchronous>, transform_indices = @transform_2, window_bounds = array<i64: 1, 128>}, {pipeline_mode = #tpu.pipeline_mode<synchronous>, transform_indices = @transform_3, window_bounds = array<i64: 128, 128>}, {pipeline_mode = #tpu.pipeline_mode<synchronous>, transform_indices = @transform_4, window_bounds = array<i64: 1, 128>}, {pipeline_mode = #tpu.pipeline_mode<synchronous>, transform_indices = @transform_5, window_bounds = array<i64: 128, 8>}, {pipeline_mode = #tpu.pipeline_mode<synchronous>, transform_indices = @transform_6, window_bounds = array<i64: 1, 8>}, {transform_indices = @transform_7, window_bounds = array<i64: 16, 8>}]} {
    %c0 = arith.constant 0 : index
    %c0_0 = arith.constant 0 : index
    %0 = vector.load %arg1[%c0, %c0_0] : memref<16x32xf32, #tpu.memory_space<vmem>>, vector<16x32xf32>
    %c0_1 = arith.constant 0 : index
    %c0_2 = arith.constant 0 : index
    %1 = vector.load %arg2[%c0_1, %c0_2] : memref<32x128xf32, #tpu.memory_space<vmem>>, vector<32x128xf32>
    %cst = arith.constant dense<0.000000e+00> : vector<16x128xf32>
    %2 = tpu.matmul %0, %1, %cst {dimension_numbers = #tpu.dot_dimension_numbers<[1], [0], [0], [1], [0, 0, 1, 1], [], []>} : vector<16x32xf32>, vector<32x128xf32>, vector<16x128xf32> -> vector<16x128xf32>
    %c0_3 = arith.constant 0 : index
    %c0_4 = arith.constant 0 : index
    %3 = vector.load %arg3[%c0_3, %c0_4] : memref<1x128xf32, #tpu.memory_space<vmem>>, vector<1x128xf32>
    %4 = vector.broadcast %3 : vector<1x128xf32> to vector<16x128xf32>
    %5 = arith.addf %2, %4 : vector<16x128xf32>
    %cst_5 = arith.constant 0.000000e+00 : f32
    %6 = vector.broadcast %cst_5 : f32 to vector<16x128xf32>
    %7 = arith.maximumf %5, %6 : vector<16x128xf32>
    %c0_6 = arith.constant 0 : index
    %c0_7 = arith.constant 0 : index
    %8 = vector.load %arg4[%c0_6, %c0_7] : memref<128x128xf32, #tpu.memory_space<vmem>>, vector<128x128xf32>
    %cst_8 = arith.constant dense<0.000000e+00> : vector<16x128xf32>
    %9 = tpu.matmul %7, %8, %cst_8 {dimension_numbers = #tpu.dot_dimension_numbers<[1], [0], [0], [1], [0, 0, 1, 1], [], []>} : vector<16x128xf32>, vector<128x128xf32>, vector<16x128xf32> -> vector<16x128xf32>
    %c0_9 = arith.constant 0 : index
    %c0_10 = arith.constant 0 : index
    %10 = vector.load %arg5[%c0_9, %c0_10] : memref<1x128xf32, #tpu.memory_space<vmem>>, vector<1x128xf32>
    %11 = vector.broadcast %10 : vector<1x128xf32> to vector<16x128xf32>
    %12 = arith.addf %9, %11 : vector<16x128xf32>
    %cst_11 = arith.constant 0.000000e+00 : f32
    %13 = vector.broadcast %cst_11 : f32 to vector<16x128xf32>
    %14 = arith.maximumf %12, %13 : vector<16x128xf32>
    %c0_12 = arith.constant 0 : index
    %c0_13 = arith.constant 0 : index
    %15 = vector.load %arg6[%c0_12, %c0_13] : memref<128x8xf32, #tpu.memory_space<vmem>>, vector<128x8xf32>
    %cst_14 = arith.constant dense<0.000000e+00> : vector<16x8xf32>
    %16 = tpu.matmul %14, %15, %cst_14 {dimension_numbers = #tpu.dot_dimension_numbers<[1], [0], [0], [1], [0, 0, 1, 1], [], []>} : vector<16x128xf32>, vector<128x8xf32>, vector<16x8xf32> -> vector<16x8xf32>
    %c0_15 = arith.constant 0 : index
    %c0_16 = arith.constant 0 : index
    %17 = vector.load %arg7[%c0_15, %c0_16] : memref<1x8xf32, #tpu.memory_space<vmem>>, vector<1x8xf32>
    %18 = vector.broadcast %17 : vector<1x8xf32> to vector<16x8xf32>
    %19 = arith.addf %16, %18 : vector<16x8xf32>
    %c0_17 = arith.constant 0 : index
    %c0_18 = arith.constant 0 : index
    %20 = vector.load %arg8[%c0_17, %c0_18] : memref<16x8xf32, #tpu.memory_space<vmem>>, vector<16x8xf32>
    tpu.vector_store %arg8[%c0_17, %c0_18], %19 {strides = array<i32>} : memref<16x8xf32, #tpu.memory_space<vmem>>, vector<16x8xf32>,
    return
  }
  func.func @transform_0(%arg0: i32) -> (i32, i32) {
    %c0_i32 = arith.constant 0 : i32
    %c0_i32_0 = arith.constant 0 : i32
    return %arg0, %c0_i32 : i32, i32
  }
  func.func @transform_1(%arg0: i32) -> (i32, i32) {
    %c0_i32 = arith.constant 0 : i32
    %c0_i32_0 = arith.constant 0 : i32
    %c0_i32_1 = arith.constant 0 : i32
    return %c0_i32, %c0_i32_0 : i32, i32
  }
  func.func @transform_2(%arg0: i32) -> (i32, i32) {
    %c0_i32 = arith.constant 0 : i32
    %c0_i32_0 = arith.constant 0 : i32
    %c0_i32_1 = arith.constant 0 : i32
    return %c0_i32, %c0_i32_0 : i32, i32
  }
  func.func @transform_3(%arg0: i32) -> (i32, i32) {
    %c0_i32 = arith.constant 0 : i32
    %c0_i32_0 = arith.constant 0 : i32
    %c0_i32_1 = arith.constant 0 : i32
    return %c0_i32, %c0_i32_0 : i32, i32
  }
  func.func @transform_4(%arg0: i32) -> (i32, i32) {
    %c0_i32 = arith.constant 0 : i32
    %c0_i32_0 = arith.constant 0 : i32
    %c0_i32_1 = arith.constant 0 : i32
    return %c0_i32, %c0_i32_0 : i32, i32
  }
  func.func @transform_5(%arg0: i32) -> (i32, i32) {
    %c0_i32 = arith.constant 0 : i32
    %c0_i32_0 = arith.constant 0 : i32
    %c0_i32_1 = arith.constant 0 : i32
    return %c0_i32, %c0_i32_0 : i32, i32
  }
  func.func @transform_6(%arg0: i32) -> (i32, i32) {
    %c0_i32 = arith.constant 0 : i32
    %c0_i32_0 = arith.constant 0 : i32
    %c0_i32_1 = arith.constant 0 : i32
    return %c0_i32, %c0_i32_0 : i32, i32
  }
  func.func @transform_7(%arg0: i32) -> (i32, i32) {
    %c0_i32 = arith.constant 0 : i32
    %c0_i32_0 = arith.constant 0 : i32
    return %arg0, %c0_i32 : i32, i32
  }
}

</mosaic_0001>

<llo_original>
// kernel: dqn_forward.1
$region0: #{dqn_forward.1}
  #allocation0 [shape = 'u32[]', space=smem, size = 0x4, offset = 0x4, fixed_abs, tag = 'smem constant byte address 0x4 - core index']
  #allocation1 [shape = 'u32[144,128]{1,0:T(1,128)}', space=vmem, size = 0x12000, scoped, tag = 'internal scratch']
  %s0 = inlined_call_operand.vmem [shape: f32[16,32], index: 0, kind: input, shape index: {}]
  %s1 = inlined_call_operand.vmem [shape: f32[32,128], index: 1, kind: input, shape index: {}]
  %s2 = inlined_call_operand.vmem [shape: f32[1,128], index: 2, kind: input, shape index: {}]
  %s3 = inlined_call_operand.vmem [shape: f32[128,128], index: 3, kind: input, shape index: {}]
  %s4 = inlined_call_operand.vmem [shape: f32[1,128], index: 4, kind: input, shape index: {}]
  %s5 = inlined_call_operand.vmem [shape: f32[128,8], index: 5, kind: input, shape index: {}]
  %s6 = inlined_call_operand.vmem [shape: f32[1,8], index: 6, kind: input, shape index: {}]
  %s7 = inlined_call_operand.vmem [shape: f32[16,8], index: 7, kind: output, shape index: {}]
  %s8 = sld [smem:[#allocation0]]
  $region38: #{dqn_forward.1} parent=0
    _
  %s10 = ssub.s32 1, %s8
  %s11 = scalar_select 0, %s10, %s8
  // Predicated region
  $region2: #{dqn_forward.1} parent=0 // pred_check
    _
  $region3: #{dqn_forward.1} parent=0 // pred_check_branch
    %13 = sbr.rel (0) target = $region5
  $region4: #{dqn_forward.1} parent=0 // pred_region
    _
  $region5: #{dqn_forward.1} parent=0 // pred_fallthru
    _
  // Predicated region
  $region6: #{dqn_forward.1} parent=0 // pred_check
    _
  $region7: #{dqn_forward.1} parent=0 // pred_check_branch
    %15 = sbr.rel (0) target = $region9
  $region8: #{dqn_forward.1} parent=0 // pred_region
    _
  $region9: #{dqn_forward.1} parent=0 // pred_fallthru
    _
  // Predicated region
  $region10: #{dqn_forward.1} parent=0 // pred_check
    _
  $region11: #{dqn_forward.1} parent=0 // pred_check_branch
    %17 = sbr.rel (0) target = $region13
  $region12: #{dqn_forward.1} parent=0 // pred_region
    _
  $region13: #{dqn_forward.1} parent=0 // pred_fallthru
    _
  // Predicated region
  $region14: #{dqn_forward.1} parent=0 // pred_check
    _
  $region15: #{dqn_forward.1} parent=0 // pred_check_branch
    %19 = sbr.rel (0) target = $region17
  $region16: #{dqn_forward.1} parent=0 // pred_region
    _
  $region17: #{dqn_forward.1} parent=0 // pred_fallthru
    _
  // Predicated region
  $region18: #{dqn_forward.1} parent=0 // pred_check
    _
  $region19: #{dqn_forward.1} parent=0 // pred_check_branch
    %21 = sbr.rel (0) target = $region21
  $region20: #{dqn_forward.1} parent=0 // pred_region
    _
  $region21: #{dqn_forward.1} parent=0 // pred_fallthru
    _
  // Predicated region
  $region22: #{dqn_forward.1} parent=0 // pred_check
    _
  $region23: #{dqn_forward.1} parent=0 // pred_check_branch
    %23 = sbr.rel (0) target = $region25
  $region24: #{dqn_forward.1} parent=0 // pred_region
    _
  $region25: #{dqn_forward.1} parent=0 // pred_fallthru
    _
  // Predicated region
  $region26: #{dqn_forward.1} parent=0 // pred_check
    _
  $region27: #{dqn_forward.1} parent=0 // pred_check_branch
    %25 = sbr.rel (0) target = $region29
  $region28: #{dqn_forward.1} parent=0 // pred_region
    _
  $region29: #{dqn_forward.1} parent=0 // pred_fallthru
    _
  %v26 = vld [vmem:[%s0] sm:$0xff]
  %v27 = vld [vmem:[%s0 + $0x8] sm:$0xff]
  %v28 = vld [vmem:[%s1] sm:$0xff]
  %v29 = vld [vmem:[%s1 + $0x8] sm:$0xff]
  %v30 = vld [vmem:[%s1 + $0x10] sm:$0xff]
  %v31 = vld [vmem:[%s1 + $0x18] sm:$0xff]
  %v32 = vld [vmem:[%s2] sm:$0x1]
  %v34 = vlaneseq
  %v35 = vshrl.u32 %v34, 7
  %v36 = vsub.s32 0, %v35
  %v37 = vrot.slane %v32, %v36
  %vm39 = vcmask 261120
  %v41 = vsel %vm39, %v26, 0
  %v44 = vsel %vm39, %v27, 0
  %46 = vmatprep.subr.mxu0 0.0
  %47 = vmatpush1.msra.mxu0 0.0
  %48 = vmatprep.subr.mxu0 0.0
  %49 = vmatpush1.msra.mxu0 0.0
  %50 = vmatprep.subr.mxu0 0.0
  %51 = vmatpush1.msra.mxu0 0.0
  %52 = vmatprep.subr.mxu0 0.0
  %53 = vmatpush1.msra.mxu0 0.0
  %54 = vmatprep.subr.mxu0 0.0
  %55 = vmatpush1.msra.mxu0 0.0
  %56 = vmatprep.subr.mxu0 0.0
  %57 = vmatpush1.msra.mxu0 0.0
  %58 = vmatprep.subr.mxu0 0.0
  %59 = vmatpush1.msra.mxu0 0.0
  %60 = vmatprep.subr.mxu0 0.0
  %61 = vmatpush1.msra.mxu0 0.0
  %62 = vmatprep.subr.mxu0 0.0
  %63 = vmatpush1.msra.mxu0 0.0
  %64 = vmatprep.subr.mxu0 0.0
  %65 = vmatpush1.msra.mxu0 0.0
  %66 = vmatprep.subr.mxu0 0.0
  %67 = vmatpush1.msra.mxu0 0.0
  %68 = vmatprep.subr.mxu0 0.0
  %69 = vmatpush1.msra.mxu0 0.0
  %70 = vmatprep.subr.mxu0 0.0
  %71 = vmatpush1.msra.mxu0 %v31
  %72 = vmatprep.subr.mxu0 0.0
  %73 = vmatpush1.msra.mxu0 %v30
  %74 = vmatprep.subr.mxu0 0.0
  %75 = vmatpush1.msra.mxu0 %v29
  %76 = vmatprep.subr.mxu0 0.0
  %77 = vmatpush1.msra.mxu0 %v28
  %78 = vmatprep.subr.mxu0 0.0
  %79 = vmatpush2.msra.mxu0 0.0
  %80 = vmatprep.subr.mxu0 0.0
  %81 = vmatpush2.msra.mxu0 0.0
  %82 = vmatprep.subr.mxu0 0.0
  %83 = vmatpush2.msra.mxu0 0.0
  %84 = vmatprep.subr.mxu0 0.0
  %85 = vmatpush2.msra.mxu0 0.0
  %86 = vmatprep.subr.mxu0 0.0
  %87 = vmatpush2.msra.mxu0 0.0
  %88 = vmatprep.subr.mxu0 0.0
  %89 = vmatpush2.msra.mxu0 0.0
  %90 = vmatprep.subr.mxu0 0.0
  %91 = vmatpush2.msra.mxu0 0.0
  %92 = vmatprep.subr.mxu0 0.0
  %93 = vmatpush2.msra.mxu0 0.0
  %94 = vmatprep.subr.mxu0 0.0
  %95 = vmatpush2.msra.mxu0 0.0
  %96 = vmatprep.subr.mxu0 0.0
  %97 = vmatpush2.msra.mxu0 0.0
  %98 = vmatprep.subr.mxu0 0.0
  %99 = vmatpush2.msra.mxu0 0.0
  %100 = vmatprep.subr.mxu0 0.0
  %101 = vmatpush2.msra.mxu0 0.0
  %102 = vmatprep.subr.mxu0 0.0
  %103 = vmatpush2.msra.mxu0 0.0
  %104 = vmatprep.subr.mxu0 0.0
  %105 = vmatpush2.msra.mxu0 0.0
  %106 = vmatprep.subr.mxu0 0.0
  %107 = vmatpush2.msra.mxu0 0.0
  %108 = vmatprep.subr.mxu0 0.0
  %109 = vmatpush2.msra.mxu0 0.0
  %110 = vmatprep.mubr.f32.mxu0 0.0
  %111 = vmatmul.mubr.f32.gmra.mxu0 %v41
  %v112 = vpop.f32.mrf.mxu0
  %v113 = vadd.f32 %v37, %v112
  %v114 = vpop.f32.mrf.mxu0
  %115 = vmatprep.mubr.f32.mxu0 0.0
  %116 = vmatmul.mubr.f32.gmra.mxu0 %v44
  %v117 = vpop.f32.mrf.mxu0
  %v118 = vadd.f32 %v37, %v117
  %v119 = vpop.f32.mrf.mxu0
  %120 = vdwg.mxu0
  %v121 = vmax.f32 %v113, 0.0
  %v122 = vmax.f32 %v118, 0.0
  %v123 = vld [vmem:[%s3] sm:$0xff]
  %v124 = vld [vmem:[%s3 + $0x8] sm:$0xff]
  %v125 = vld [vmem:[%s3 + $0x10] sm:$0xff]
  %v126 = vld [vmem:[%s3 + $0x18] sm:$0xff]
  %v127 = vld [vmem:[%s3 + $0x20] sm:$0xff]
  %v128 = vld [vmem:[%s3 + $0x28] sm:$0xff]
  %v129 = vld [vmem:[%s3 + $0x30] sm:$0xff]
  %v130 = vld [vmem:[%s3 + $0x38] sm:$0xff]
  %v131 = vld [vmem:[%s3 + $0x40] sm:$0xff]
  %v132 = vld [vmem:[%s3 + $0x48] sm:$0xff]
  %v133 = vld [vmem:[%s3 + $0x50] sm:$0xff]
  %v134 = vld [vmem:[%s3 + $0x58] sm:$0xff]
  %v135 = vld [vmem:[%s3 + $0x60] sm:$0xff]
  %v136 = vld [vmem:[%s3 + $0x68] sm:$0xff]
  %v137 = vld [vmem:[%s3 + $0x70] sm:$0xff]
  %v138 = vld [vmem:[%s3 + $0x78] sm:$0xff]
  %v139 = vld [vmem:[%s4] sm:$0x1]
  %v141 = vlaneseq
  %v142 = vshrl.u32 %v141, 7
  %v143 = vsub.s32 0, %v142
  %v144 = vrot.slane %v139, %v143
  %146 = vmatprep.subr.mxu0 0.0
  %147 = vmatpush1.msra.mxu0 %v138
  %148 = vmatprep.subr.mxu0 0.0
  %149 = vmatpush1.msra.mxu0 %v137
  %150 = vmatprep.subr.mxu0 0.0
  %151 = vmatpush1.msra.mxu0 %v136
  %152 = vmatprep.subr.mxu0 0.0
  %153 = vmatpush1.msra.mxu0 %v135
  %154 = vmatprep.subr.mxu0 0.0
  %155 = vmatpush1.msra.mxu0 %v134
  %156 = vmatprep.subr.mxu0 0.0
  %157 = vmatpush1.msra.mxu0 %v133
  %158 = vmatprep.subr.mxu0 0.0
  %159 = vmatpush1.msra.mxu0 %v132
  %160 = vmatprep.subr.mxu0 0.0
  %161 = vmatpush1.msra.mxu0 %v131
  %162 = vmatprep.subr.mxu0 0.0
  %163 = vmatpush1.msra.mxu0 %v130
  %164 = vmatprep.subr.mxu0 0.0
  %165 = vmatpush1.msra.mxu0 %v129
  %166 = vmatprep.subr.mxu0 0.0
  %167 = vmatpush1.msra.mxu0 %v128
  %168 = vmatprep.subr.mxu0 0.0
  %169 = vmatpush1.msra.mxu0 %v127
  %170 = vmatprep.subr.mxu0 0.0
  %171 = vmatpush1.msra.mxu0 %v126
  %172 = vmatprep.subr.mxu0 0.0
  %173 = vmatpush1.msra.mxu0 %v125
  %174 = vmatprep.subr.mxu0 0.0
  %175 = vmatpush1.msra.mxu0 %v124
  %176 = vmatprep.subr.mxu0 0.0
  %177 = vmatpush1.msra.mxu0 %v123
  %178 = vmatprep.subr.mxu0 0.0
  %179 = vmatpush2.msra.mxu0 0.0
  %180 = vmatprep.subr.mxu0 0.0
  %181 = vmatpush2.msra.mxu0 0.0
  %182 = vmatprep.subr.mxu0 0.0
  %183 = vmatpush2.msra.mxu0 0.0
  %184 = vmatprep.subr.mxu0 0.0
  %185 = vmatpush2.msra.mxu0 0.0
  %186 = vmatprep.subr.mxu0 0.0
  %187 = vmatpush2.msra.mxu0 0.0
  %188 = vmatprep.subr.mxu0 0.0
  %189 = vmatpush2.msra.mxu0 0.0
  %190 = vmatprep.subr.mxu0 0.0
  %191 = vmatpush2.msra.mxu0 0.0
  %192 = vmatprep.subr.mxu0 0.0
  %193 = vmatpush2.msra.mxu0 0.0
  %194 = vmatprep.subr.mxu0 0.0
  %195 = vmatpush2.msra.mxu0 0.0
  %196 = vmatprep.subr.mxu0 0.0
  %197 = vmatpush2.msra.mxu0 0.0
  %198 = vmatprep.subr.mxu0 0.0
  %199 = vmatpush2.msra.mxu0 0.0
  %200 = vmatprep.subr.mxu0 0.0
  %201 = vmatpush2.msra.mxu0 0.0
  %202 = vmatprep.subr.mxu0 0.0
  %203 = vmatpush2.msra.mxu0 0.0
  %204 = vmatprep.subr.mxu0 0.0
  %205 = vmatpush2.msra.mxu0 0.0
  %206 = vmatprep.subr.mxu0 0.0
  %207 = vmatpush2.msra.mxu0 0.0
  %208 = vmatprep.subr.mxu0 0.0
  %209 = vmatpush2.msra.mxu0 0.0
  %210 = vmatprep.mubr.f32.mxu0 0.0
  %211 = vmatmul.mubr.f32.gmra.mxu0 %v121
  %v212 = vpop.f32.mrf.mxu0
  %v213 = vadd.f32 %v144, %v212
  %v214 = vpop.f32.mrf.mxu0
  %215 = vmatprep.mubr.f32.mxu0 0.0
  %216 = vmatmul.mubr.f32.gmra.mxu0 %v122
  %v217 = vpop.f32.mrf.mxu0
  %v218 = vadd.f32 %v144, %v217
  %v219 = vpop.f32.mrf.mxu0
  %220 = vdwg.mxu0
  %v221 = vmax.f32 %v213, 0.0
  %v222 = vmax.f32 %v218, 0.0
  %v223 = vld [vmem:[%s5] sm:$0xff]
  %v224 = vld [vmem:[%s5 + $0x8] sm:$0xff]
  %v225 = vld [vmem:[%s5 + $0x10] sm:$0xff]
  %v226 = vld [vmem:[%s5 + $0x18] sm:$0xff]
  %v227 = vld [vmem:[%s5 + $0x20] sm:$0xff]
  %v228 = vld [vmem:[%s5 + $0x28] sm:$0xff]
  %v229 = vld [vmem:[%s5 + $0x30] sm:$0xff]
  %v230 = vld [vmem:[%s5 + $0x38] sm:$0xff]
  %v231 = vld [vmem:[%s5 + $0x40] sm:$0xff]
  %v232 = vld [vmem:[%s5 + $0x48] sm:$0xff]
  %v233 = vld [vmem:[%s5 + $0x50] sm:$0xff]
  %v234 = vld [vmem:[%s5 + $0x58] sm:$0xff]
  %v235 = vld [vmem:[%s5 + $0x60] sm:$0xff]
  %v236 = vld [vmem:[%s5 + $0x68] sm:$0xff]
  %v237 = vld [vmem:[%s5 + $0x70] sm:$0xff]
  %v238 = vld [vmem:[%s5 + $0x78] sm:$0xff]
  %v239 = vld [vmem:[%s6] sm:$0x1]
  %v241 = vlaneseq
  %v242 = vshrl.u32 %v241, 7
  %v243 = vsub.s32 0, %v242
  %v244 = vrot.slane %v239, %v243
  %246 = vmatprep.subr.mxu0 0.0
  %247 = vmatpush1.msra.mxu0 %v238
  %248 = vmatprep.subr.mxu0 0.0
  %249 = vmatpush1.msra.mxu0 %v237
  %250 = vmatprep.subr.mxu0 0.0
  %251 = vmatpush1.msra.mxu0 %v236
  %252 = vmatprep.subr.mxu0 0.0
  %253 = vmatpush1.msra.mxu0 %v235
  %254 = vmatprep.subr.mxu0 0.0
  %255 = vmatpush1.msra.mxu0 %v234
  %256 = vmatprep.subr.mxu0 0.0
  %257 = vmatpush1.msra.mxu0 %v233
  %258 = vmatprep.subr.mxu0 0.0
  %259 = vmatpush1.msra.mxu0 %v232
  %260 = vmatprep.subr.mxu0 0.0
  %261 = vmatpush1.msra.mxu0 %v231
  %262 = vmatprep.subr.mxu0 0.0
  %263 = vmatpush1.msra.mxu0 %v230
  %264 = vmatprep.subr.mxu0 0.0
  %265 = vmatpush1.msra.mxu0 %v229
  %266 = vmatprep.subr.mxu0 0.0
  %267 = vmatpush1.msra.mxu0 %v228
  %268 = vmatprep.subr.mxu0 0.0
  %269 = vmatpush1.msra.mxu0 %v227
  %270 = vmatprep.subr.mxu0 0.0
  %271 = vmatpush1.msra.mxu0 %v226
  %272 = vmatprep.subr.mxu0 0.0
  %273 = vmatpush1.msra.mxu0 %v225
  %274 = vmatprep.subr.mxu0 0.0
  %275 = vmatpush1.msra.mxu0 %v224
  %276 = vmatprep.subr.mxu0 0.0
  %277 = vmatpush1.msra.mxu0 %v223
  %278 = vmatprep.subr.mxu0 0.0
  %279 = vmatpush2.msra.mxu0 0.0
  %280 = vmatprep.subr.mxu0 0.0
  %281 = vmatpush2.msra.mxu0 0.0
  %282 = vmatprep.subr.mxu0 0.0
  %283 = vmatpush2.msra.mxu0 0.0
  %284 = vmatprep.subr.mxu0 0.0
  %285 = vmatpush2.msra.mxu0 0.0
  %286 = vmatprep.subr.mxu0 0.0
  %287 = vmatpush2.msra.mxu0 0.0
  %288 = vmatprep.subr.mxu0 0.0
  %289 = vmatpush2.msra.mxu0 0.0
  %290 = vmatprep.subr.mxu0 0.0
  %291 = vmatpush2.msra.mxu0 0.0
  %292 = vmatprep.subr.mxu0 0.0
  %293 = vmatpush2.msra.mxu0 0.0
  %294 = vmatprep.subr.mxu0 0.0
  %295 = vmatpush2.msra.mxu0 0.0
  %296 = vmatprep.subr.mxu0 0.0
  %297 = vmatpush2.msra.mxu0 0.0
  %298 = vmatprep.subr.mxu0 0.0
  %299 = vmatpush2.msra.mxu0 0.0
  %300 = vmatprep.subr.mxu0 0.0
  %301 = vmatpush2.msra.mxu0 0.0
  %302 = vmatprep.subr.mxu0 0.0
  %303 = vmatpush2.msra.mxu0 0.0
  %304 = vmatprep.subr.mxu0 0.0
  %305 = vmatpush2.msra.mxu0 0.0
  %306 = vmatprep.subr.mxu0 0.0
  %307 = vmatpush2.msra.mxu0 0.0
  %308 = vmatprep.subr.mxu0 0.0
  %309 = vmatpush2.msra.mxu0 0.0
  %310 = vmatprep.mubr.f32.mxu0 0.0
  %311 = vmatmul.mubr.f32.gmra.mxu0 %v221
  %v312 = vpop.f32.mrf.mxu0
  %v313 = vadd.f32 %v244, %v312
  %v314 = vpop.f32.mrf.mxu0
  %315 = vmatprep.mubr.f32.mxu0 0.0
  %316 = vmatmul.mubr.f32.gmra.mxu0 %v222
  %v317 = vpop.f32.mrf.mxu0
  %v318 = vadd.f32 %v244, %v317
  %v319 = vpop.f32.mrf.mxu0
  %320 = vdwg.mxu0
  %vm321 = vcmask 64512
  %322 = vst.msk [vmem:[%s7] sm:$0xff] %vm321, %v313
  %323 = vst.msk [vmem:[%s7 + $0x8] sm:$0xff] %vm321, %v318
  // Predicated region
  $region30: #{dqn_forward.1} parent=0 // pred_check
    _
  $region31: #{dqn_forward.1} parent=0 // pred_check_branch
    %325 = sbr.rel (0) target = $region33
  $region32: #{dqn_forward.1} parent=0 // pred_region
    _
  $region33: #{dqn_forward.1} parent=0 // pred_fallthru
    _
  // Predicated region
  $region34: #{dqn_forward.1} parent=0 // pred_check
    _
  $region35: #{dqn_forward.1} parent=0 // pred_check_branch
    %327 = sbr.rel (0) target = $region37
  $region36: #{dqn_forward.1} parent=0 // pred_region
    _
  $region37: #{dqn_forward.1} parent=0 // pred_fallthru
    _

</llo_original>
